<compile_context>
chip_gen: v5e
topology: v5e:2x2
jax: 0.10.0
libtpu: 0.0.40
codegen_flags: <defaults>
</compile_context>

<pallas_src>
import functools

import jax
import jax.numpy as jnp
from jax.experimental import pallas as pl
from jax.experimental.pallas import tpu as pltpu

# Defaults matching DoublePendulum.__init__.
LENGTH1 = 1.0
LENGTH2 = 1.0
MASS1 = 1.0
MASS2 = 1.0
GRAVITY = 10.0

_LANE = 128


def _round_up(x, m):
    return ((x + m - 1) // m) * m


def _double_pendulum_kernel(y_ref, dydt_ref, *, l1, l2, m1, m2, g):
    """y_ref / dydt_ref: (4, TN) blocks; rows = (theta1, z1, theta2, z2), batch on lanes."""
    theta1 = y_ref[0:1, :]
    z1 = y_ref[1:2, :]
    theta2 = y_ref[2:3, :]
    z2 = y_ref[3:4, :]

    delta = theta1 - theta2
    c = jnp.cos(delta)
    s = jnp.sin(delta)
    sin_t1 = jnp.sin(theta1)
    sin_t2 = jnp.sin(theta2)
    z1sq = z1 * z1
    z2sq = z2 * z2

    denom = m1 + m2 * s * s
    inv_denom = 1.0 / denom  # exact reciprocal: accuracy matters when fed to an ODE integrator

    term1 = (m2 * g) * sin_t2 * c
    term2 = m2 * s * (l1 * z1sq * c + l2 * z2sq)
    term3 = ((m1 + m2) * g) * sin_t1
    z1dot = (term1 - term2 - term3) * ((1.0 / l1) * inv_denom)

    term4 = l1 * z1sq * s - g * sin_t2
    term5 = g * sin_t1 * c
    term6 = (m2 * l2) * z2sq * s * c
    z2dot = ((m1 + m2) * (term4 + term5) + term6) * ((1.0 / l2) * inv_denom)

    out = jnp.concatenate([z1, z1dot, z2, z2dot], axis=0)  # (4, TN)
    dydt_ref[...] = out.astype(dydt_ref.dtype)


def double_pendulum_forward(time, y,
                            length1=LENGTH1, length2=LENGTH2,
                            mass1=MASS1, mass2=MASS2, gravity=GRAVITY,
                            block_cols=4096):
    """Pallas equivalent of DoublePendulum.forward(time, y).

    Accepts y of shape (4,) (the original PyTorch semantics) or a lane-dense
    batch (4, N) of independent states.  `time` is accepted for signature
    parity but unused (the ODE is autonomous), so it never enters the kernel.
    """
    del time  # autonomous RHS; matches the (unused) `time` arg of the PyTorch forward
    y = jnp.asarray(y, dtype=jnp.float32)
    single = (y.ndim == 1)
    y2 = y.reshape(4, 1) if single else y
    if y2.shape[0] != 4:
        raise ValueError(f"state must have leading dim 4, got shape {y2.shape}")

    n = y2.shape[1]
    # Lane-dense tiling: tile width is a multiple of 128; conservative block
    # footprint (4 x 4096 x 4 B = 64 KiB per buffer) fits every generation's
    # scoped-VMEM default (v5e 16 MiB / v6e 32 MiB / v7x 32 MiB) with room to spare.
    tn = min(int(block_cols), _round_up(n, _LANE))
    tn = _round_up(tn, _LANE)
    n_pad = _round_up(n, tn)
    if n_pad != n:
        # Zero-padding is safe: denom = m1 + m2*sin^2 >= m1 > 0, no NaN/Inf produced.
        y2 = jnp.pad(y2, ((0, 0), (0, n_pad - n)))

    kernel = functools.partial(
        _double_pendulum_kernel,
        l1=float(length1), l2=float(length2),
        m1=float(mass1), m2=float(mass2), g=float(gravity),
    )

    out = pl.pallas_call(
        kernel,
        out_shape=jax.ShapeDtypeStruct((4, n_pad), jnp.float32),
        grid=(n_pad // tn,),
        in_specs=[pl.BlockSpec((4, tn), lambda i: (0, i))],
        out_specs=pl.BlockSpec((4, tn), lambda i: (0, i)),
        compiler_params=pltpu.CompilerParams(dimension_semantics=("parallel",)),
    )(y2)

    out = out[:, :n]
    return out.reshape(4) if single else out


def _reference(y, l1=LENGTH1, l2=LENGTH2, m1=MASS1, m2=MASS2, g=GRAVITY):
    """Pure-JAX reference (same math as the PyTorch forward), y: (4, N) or (4,)."""
    y = jnp.asarray(y, dtype=jnp.float32)
    t1, z1, t2, z2 = y[0], y[1], y[2], y[3]
    c, s = jnp.cos(t1 - t2), jnp.sin(t1 - t2)
    z1sq, z2sq = z1 ** 2, z2 ** 2
    denom = m1 + m2 * s ** 2
    term1 = m2 * g * jnp.sin(t2) * c
    term2 = m2 * s * (l1 * z1sq * c + l2 * z2sq)
    term3 = (m1 + m2) * g * jnp.sin(t1)
    z1dot = (term1 - term2 - term3) / (l1 * denom)
    term4 = l1 * z1sq * s - g * jnp.sin(t2)
    term5 = g * jnp.sin(t1) * c
    term6 = m2 * l2 * z2sq * s * c
    z2dot = ((m1 + m2) * (term4 + term5) + term6) / (l2 * denom)
    return jnp.stack([z1, z1dot, z2, z2dot], axis=0)


if __name__ == "__main__":
    key = jax.random.PRNGKey(0)
    N = 256  # small batch of independent double-pendulum states (multiple of 128)
    y_batch = jax.random.uniform(key, (4, N), dtype=jnp.float32, minval=-1.0, maxval=1.0)
    time = jnp.float32(0.0)

    # Batched lane-dense path.
    dydt_batch = jax.block_until_ready(double_pendulum_forward(time, y_batch))
    ref_batch = _reference(y_batch)
    assert dydt_batch.shape == (4, N) and dydt_batch.dtype == jnp.float32
    assert jnp.allclose(dydt_batch, ref_batch, atol=1e-5, rtol=1e-5)

    # Single-state path: exact semantics of the PyTorch DoublePendulum.forward.
    y_single = y_batch[:, 0]
    dydt_single = jax.block_until_ready(double_pendulum_forward(time, y_single))
    assert dydt_single.shape == (4,) and dydt_single.dtype == jnp.float32
    assert jnp.allclose(dydt_single, ref_batch[:, 0], atol=1e-5, rtol=1e-5)

    print("KERNEL_OK")
</pallas_src>

<mosaic_0001>
module attributes {stable_mosaic.version = 11 : i64} {
  func.func @_double_pendulum_kernel(%arg0: i32, %arg1: memref<4x256xf32, #tpu.memory_space<vmem>>, %arg2: memref<4x256xf32, #tpu.memory_space<vmem>>) attributes {dimension_semantics = [#tpu.dimension_semantics<parallel>], iteration_bounds = array<i64: 1>, scalar_prefetch = 0 : i64, scratch_operands = 0 : i64, tpu.core_type = #tpu.core_type<tc>, window_params = [{transform_indices = @transform_0, window_bounds = array<i64: 4, 256>}, {transform_indices = @transform_1, window_bounds = array<i64: 4, 256>}]} {
    %c0 = arith.constant 0 : index
    %c0_0 = arith.constant 0 : index
    %0 = vector.load %arg1[%c0, %c0_0] : memref<4x256xf32, #tpu.memory_space<vmem>>, vector<1x256xf32>
    %c1 = arith.constant 1 : index
    %c0_1 = arith.constant 0 : index
    %1 = vector.load %arg1[%c1, %c0_1] : memref<4x256xf32, #tpu.memory_space<vmem>>, vector<1x256xf32>
    %c2 = arith.constant 2 : index
    %c0_2 = arith.constant 0 : index
    %2 = vector.load %arg1[%c2, %c0_2] : memref<4x256xf32, #tpu.memory_space<vmem>>, vector<1x256xf32>
    %c3 = arith.constant 3 : index
    %c0_3 = arith.constant 0 : index
    %3 = vector.load %arg1[%c3, %c0_3] : memref<4x256xf32, #tpu.memory_space<vmem>>, vector<1x256xf32>
    %4 = arith.subf %0, %2 : vector<1x256xf32>
    %5 = math.cos %4 : vector<1x256xf32>
    %6 = math.sin %4 : vector<1x256xf32>
    %7 = math.sin %0 : vector<1x256xf32>
    %8 = math.sin %2 : vector<1x256xf32>
    %9 = arith.mulf %1, %1 : vector<1x256xf32>
    %10 = arith.mulf %3, %3 : vector<1x256xf32>
    %cst = arith.constant 1.000000e+00 : f32
    %11 = vector.broadcast %cst : f32 to vector<1x256xf32>
    %12 = arith.mulf %11, %6 : vector<1x256xf32>
    %13 = arith.mulf %12, %6 : vector<1x256xf32>
    %cst_4 = arith.constant 1.000000e+00 : f32
    %14 = vector.broadcast %cst_4 : f32 to vector<1x256xf32>
    %15 = arith.addf %14, %13 : vector<1x256xf32>
    %cst_5 = arith.constant 1.000000e+00 : f32
    %16 = vector.broadcast %cst_5 : f32 to vector<1x256xf32>
    %17 = arith.divf %16, %15 : vector<1x256xf32>
    %cst_6 = arith.constant 1.000000e+01 : f32
    %18 = vector.broadcast %cst_6 : f32 to vector<1x256xf32>
    %19 = arith.mulf %18, %8 : vector<1x256xf32>
    %20 = arith.mulf %19, %5 : vector<1x256xf32>
    %cst_7 = arith.constant 1.000000e+00 : f32
    %21 = vector.broadcast %cst_7 : f32 to vector<1x256xf32>
    %22 = arith.mulf %21, %6 : vector<1x256xf32>
    %cst_8 = arith.constant 1.000000e+00 : f32
    %23 = vector.broadcast %cst_8 : f32 to vector<1x256xf32>
    %24 = arith.mulf %23, %9 : vector<1x256xf32>
    %25 = arith.mulf %24, %5 : vector<1x256xf32>
    %cst_9 = arith.constant 1.000000e+00 : f32
    %26 = vector.broadcast %cst_9 : f32 to vector<1x256xf32>
    %27 = arith.mulf %26, %10 : vector<1x256xf32>
    %28 = arith.addf %25, %27 : vector<1x256xf32>
    %29 = arith.mulf %22, %28 : vector<1x256xf32>
    %cst_10 = arith.constant 2.000000e+01 : f32
    %30 = vector.broadcast %cst_10 : f32 to vector<1x256xf32>
    %31 = arith.mulf %30, %7 : vector<1x256xf32>
    %32 = arith.subf %20, %29 : vector<1x256xf32>
    %33 = arith.subf %32, %31 : vector<1x256xf32>
    %cst_11 = arith.constant 1.000000e+00 : f32
    %34 = vector.broadcast %cst_11 : f32 to vector<1x256xf32>
    %35 = arith.mulf %34, %17 : vector<1x256xf32>
    %36 = arith.mulf %33, %35 : vector<1x256xf32>
    %cst_12 = arith.constant 1.000000e+00 : f32
    %37 = vector.broadcast %cst_12 : f32 to vector<1x256xf32>
    %38 = arith.mulf %37, %9 : vector<1x256xf32>
    %39 = arith.mulf %38, %6 : vector<1x256xf32>
    %cst_13 = arith.constant 1.000000e+01 : f32
    %40 = vector.broadcast %cst_13 : f32 to vector<1x256xf32>
    %41 = arith.mulf %40, %8 : vector<1x256xf32>
    %42 = arith.subf %39, %41 : vector<1x256xf32>
    %cst_14 = arith.constant 1.000000e+01 : f32
    %43 = vector.broadcast %cst_14 : f32 to vector<1x256xf32>
    %44 = arith.mulf %43, %7 : vector<1x256xf32>
    %45 = arith.mulf %44, %5 : vector<1x256xf32>
    %cst_15 = arith.constant 1.000000e+00 : f32
    %46 = vector.broadcast %cst_15 : f32 to vector<1x256xf32>
    %47 = arith.mulf %46, %10 : vector<1x256xf32>
    %48 = arith.mulf %47, %6 : vector<1x256xf32>
    %49 = arith.mulf %48, %5 : vector<1x256xf32>
    %50 = arith.addf %42, %45 : vector<1x256xf32>
    %cst_16 = arith.constant 2.000000e+00 : f32
    %51 = vector.broadcast %cst_16 : f32 to vector<1x256xf32>
    %52 = arith.mulf %51, %50 : vector<1x256xf32>
    %53 = arith.addf %52, %49 : vector<1x256xf32>
    %cst_17 = arith.constant 1.000000e+00 : f32
    %54 = vector.broadcast %cst_17 : f32 to vector<1x256xf32>
    %55 = arith.mulf %54, %17 : vector<1x256xf32>
    %56 = arith.mulf %53, %55 : vector<1x256xf32>
    %57 = tpu.concatenate %1, %36, %3, %56 in 0 : vector<1x256xf32>, vector<1x256xf32>, vector<1x256xf32>, vector<1x256xf32> -> vector<4x256xf32>
    %c0_18 = arith.constant 0 : index
    %c0_19 = arith.constant 0 : index
    %58 = vector.load %arg2[%c0_18, %c0_19] : memref<4x256xf32, #tpu.memory_space<vmem>>, vector<4x256xf32>
    tpu.vector_store %arg2[%c0_18, %c0_19], %57 {strides = array<i32>} : memref<4x256xf32, #tpu.memory_space<vmem>>, vector<4x256xf32>,
    return
  }
  func.func @transform_0(%arg0: i32) -> (i32, i32) {
    %c0_i32 = arith.constant 0 : i32
    %c0_i32_0 = arith.constant 0 : i32
    return %c0_i32, %arg0 : i32, i32
  }
  func.func @transform_1(%arg0: i32) -> (i32, i32) {
    %c0_i32 = arith.constant 0 : i32
    %c0_i32_0 = arith.constant 0 : i32
    return %c0_i32, %arg0 : i32, i32
  }
}

</mosaic_0001>

<llo_original>
// kernel: tpu_custom_call.1
$region0: #{tpu_custom_call.1}
  #allocation0 [shape = 'u32[]', space=smem, size = 0x4, offset = 0x4, fixed_abs, tag = 'smem constant byte address 0x4 - core index']
  #allocation1 [shape = 'u32[72,128]{1,0:T(1,128)}', space=vmem, size = 0x9000, scoped, tag = 'internal scratch']
  %s0 = inlined_call_operand.hbm [shape: f32[4,256], index: 0, kind: input, shape index: {}]
  %s1 = inlined_call_operand.hbm [shape: f32[4,256], index: 1, kind: output, shape index: {}]
  %s2 = sld [smem:[#allocation0]]
  $region18: #{tpu_custom_call.1} parent=0
    _
  %s4 = ssub.s32 1, %s2
  %s5 = scalar_select 0, %s4, %s2
  $region1: #{tpu_custom_call.1} parent=0
    #allocation2 [shape = 'u8[4096]{0}', space=vmem, size = 0x1000, scoped, tag = 'input window, operand 0, single buffered']
    #allocation3 [shape = 's32[1]{0}', space=sflag, size = 0x4, scoped, tag = 'scoped memory for tpu_custom_call.1']
    #allocation4 [shape = 's32[1]{0}', space=sflag, size = 0x4, scoped, tag = 'scoped memory for tpu_custom_call.1']
    #allocation5 [shape = 'u8[4096]{0}', space=vmem, size = 0x1000, scoped, tag = 'output window, operand 0, single buffered']
    %6 = vsyncpa [#allocation3], 0
    %7 = vsyncpa [#allocation4], 0
    // Predicated region
    $region2: #{tpu_custom_call.1} parent=1 // pred_check
      _
    $region3: #{tpu_custom_call.1} parent=1 // pred_check_branch
      %9 = sbr.rel (0) target = $region5
    $region4: #{tpu_custom_call.1} parent=1 // pred_region
      %11 = vsyncadd [#allocation3], 0
      %s13 = sshll.u32 %s0, 4
      %s14 = int_to_ptr.hbm [resolvable:$true] %s13
      %s15 = sshll.u32 [#allocation2], 4
      %s16 = int_to_ptr.vmem [resolvable:$true] %s15
      %18 = dma.hbm_to_vmem [thread:$0]  %s14, 128, %s16, [#allocation3]
    $region5: #{tpu_custom_call.1} parent=1 // pred_fallthru
      _
    // Predicated region
    $region6: #{tpu_custom_call.1} parent=1 // pred_check
      _
    $region7: #{tpu_custom_call.1} parent=1 // pred_check_branch
      %20 = sbr.rel (0) target = $region9
    $region8: #{tpu_custom_call.1} parent=1 // pred_region
      %22 = dma.done [#allocation3], 128
    $region9: #{tpu_custom_call.1} parent=1 // pred_fallthru
      _
    %v23 = vld [vmem:[#allocation2] ss:$4 sm:$0x3]
    %s24 = scalar_lea.vmem [#allocation2], 1
    %v25 = vld [vmem:[%s24] ss:$4 sm:$0x3]
    %s26 = scalar_lea.vmem [#allocation2], 2
    %v27 = vld [vmem:[%s26] ss:$4 sm:$0x3]
    %s28 = scalar_lea.vmem [#allocation2], 3
    %v29 = vld [vmem:[%s28] ss:$4 sm:$0x3]
    %v30 = vsub.f32 %v23, %v27
    %v31 = vand.u32 2147483647, %v30
    %vm32 = vcmp.le.f32.partialorder %v31, 0.7853982
    %vm33 = vcmp.lt.s32.totalorder %v30, 0
    %v34 = vand.u32 %v30, 2139095040
    %v35 = vshrl.u32 %v34, 23
    %v36 = vsub.s32 %v35, 127
    %v37 = vand.u32 2147483647, %v30
    %v38 = vand.u32 %v37, 8388607
    %v39 = vor.u32 %v38, 8388608
    %v40 = vsub.s32 0, %v39
    %v41 = vadd.s32 %v36, 1
    %vm42 = vcmp.gt.s32.totalorder %v41, 0
    %v43 = vsel %vm42, %v41, 0
    %v44 = vshrl.u32 %v43, 5
    %v45 = vand.u32 %v43, 31
    %v46 = vsub.s32 32, %v45
    %v47 = vshrl.u32 683565275, %v46
    %v48 = vshll.u32 683565275, %v45
    %v49 = vshrl.u32 2475754826, %v46
    %v50 = vor.u32 %v48, %v49
    %v51 = vshll.u32 2475754826, %v45
    %v52 = vshrl.u32 2131351028, %v46
    %v53 = vor.u32 %v51, %v52
    %v54 = vshll.u32 2131351028, %v45
    %v55 = vshrl.u32 2102212464, %v46
    %v56 = vor.u32 %v54, %v55
    %v57 = vshll.u32 2102212464, %v45
    %v58 = vshrl.u32 920167782, %v46
    %v59 = vor.u32 %v57, %v58
    %v60 = vshll.u32 920167782, %v45
    %v61 = vshrl.u32 1326507024, %v46
    %v62 = vor.u32 %v60, %v61
    %vm63 = vcmp.lt.s32.totalorder %v44, 1
    %vm64 = vcmp.lt.s32.totalorder %v44, 2
    %vm65 = vcmp.lt.s32.totalorder %v44, 3
    %vm66 = vcmp.lt.s32.totalorder %v44, 4
    %v67 = vsel %vm63, %v47, %v50
    %v68 = vsel %vm66, %v56, 2102212464
    %v69 = vsel %vm65, %v53, %v68
    %v70 = vsel %vm64, %v67, %v69
    %v71 = vsel %vm63, %v50, %v53
    %v72 = vsel %vm66, %v59, 920167782
    %v73 = vsel %vm65, %v56, %v72
    %v74 = vsel %vm64, %v71, %v73
    %v75 = vsel %vm63, %v53, %v56
    %v76 = vsel %vm66, %v62, 1326507024
    %v77 = vsel %vm65, %v59, %v76
    %v78 = vsel %vm64, %v75, %v77
    %v79 = vshll.u32 %v39, 8
    %v80 = vand.u32 %v79, 65535
    %v81 = vshrl.u32 %v79, 16
    %v82 = vand.u32 %v78, 65535
    %v83 = vshrl.u32 %v78, 16
    %v84 = vmul.u32 %v80, %v82
    %v85 = vmul.u32 %v80, %v83
    %v86 = vmul.u32 %v81, %v82
    %v87 = vmul.u32 %v81, %v83
    %v88 = vshll.u32 %v85, 16
    %v89 = vshrl.u32 %v85, 16
    %v90 = vshll.u32 %v86, 16
    %v91 = vshrl.u32 %v86, 16
    %vm92 = vc.u32 %v84, %v88
    %v93 = vsel %vm92, 1, 0
    %v94 = vadd.s32 %v84, %v88
    %v95 = vadd.s32 %v87, %v93
    %vm96 = vc.u32 %v94, %v90
    %v97 = vsel %vm96, 1, 0
    %v98 = vadd.s32 %v94, %v90
    %v99 = vadd.s32 %v95, %v97
    %v100 = vadd.s32 %v99, %v89
    %v101 = vadd.s32 %v100, %v91
    %v102 = vand.u32 %v79, 65535
    %v103 = vshrl.u32 %v79, 16
    %v104 = vand.u32 %v74, 65535
    %v105 = vshrl.u32 %v74, 16
    %v106 = vmul.u32 %v102, %v104
    %v107 = vmul.u32 %v102, %v105
    %v108 = vmul.u32 %v103, %v104
    %v109 = vmul.u32 %v103, %v105
    %v110 = vshll.u32 %v107, 16
    %v111 = vshrl.u32 %v107, 16
    %v112 = vshll.u32 %v108, 16
    %v113 = vshrl.u32 %v108, 16
    %vm114 = vc.u32 %v106, %v110
    %v115 = vsel %vm114, 1, 0
    %v116 = vadd.s32 %v106, %v110
    %v117 = vadd.s32 %v109, %v115
    %vm118 = vc.u32 %v116, %v112
    %v119 = vsel %vm118, 1, 0
    %v120 = vadd.s32 %v116, %v112
    %v121 = vadd.s32 %v117, %v119
    %v122 = vadd.s32 %v121, %v111
    %v123 = vadd.s32 %v122, %v113
    %v124 = vmul.u32 %v79, %v70
    %v125 = vadd.s32 %v101, %v120
    %vm126 = vc.u32 %v101, %v120
    %v127 = vadd.s32 %v123, 1
    %v128 = vsel %vm126, %v127, %v123
    %v129 = vadd.s32 %v124, %v128
    %v130 = vadd.s32 %v129, 536870912
    %v131 = vshrl.u32 %v130, 30
    %v132 = vshll.u32 %v131, 30
    %v133 = vsub.s32 %v129, %v132
    %vm134 = vcmp.lt.s32.totalorder %v133, 0
    %v135 = vsub.s32 0, %v133
    %v136 = vsel %vm134, %v135, %v133
    %v137 = vclz %v136
    %v138 = vsub.s32 %v137, 2
    %vm139 = vcmp.gt.s32.totalorder 0, %v138
    %v140 = vsel %vm139, 0, %v138
    %v141 = vsub.s32 32, %v140
    %v142 = vshll.u32 %v133, %v140
    %v143 = vshrl.u32 %v125, %v141
    %v144 = vor.u32 %v142, %v143
    %v145 = vsub.s32 4294967266, %v140
    %v146 = vadd.s32 %v145, 127
    %v147 = vshll.u32 %v146, 23
    %v148 = vor.u32 4788187, %v147
    %v149 = vand.u32 2147483647, %v148
    %v151 = vcvt.s32.f32 %v144
    %v152 = vmul.f32 %v151, %v149
    %v153 = vxor.u32 %v152, 2147483648
    %v154 = vsel %vm33, %v153, %v152
    %v155 = vsub.s32 4, %v131
    %v156 = vsel %vm33, %v155, %v131
    %v157 = vsel %vm32, %v30, %v154
    %v158 = vsel %vm32, 0, %v156
    %v159 = vmul.f32 %v157, %v157
    %v160 = vmul.f32 %v159, -0.001358992
    %v161 = vadd.f32 %v160, 0.041655596
    %v162 = vmul.f32 %v159, %v161
    %v163 = vadd.f32 %v162, -0.4999988
    %v164 = vmul.f32 %v159, %v163
    %v165 = vadd.f32 1.0, %v164
    %v166 = vmul.f32 %v157, %v157
    %v167 = vmul.f32 %v166, -0.00019511016
    %v168 = vadd.f32 %v167, 0.008332121
    %v169 = vmul.f32 %v166, %v168
    %v170 = vadd.f32 %v169, -0.16666654
    %v171 = vmul.f32 %v166, %v170
    %v172 = vadd.f32 %v171, 1.0
    %v173 = vmul.f32 %v172, %v157
    %vm174 = vweird.f32 %v30
    %v175 = vand.u32 %v158, 3
    %vm176 = vcmp.lt.s32.totalorder %v175, 2
    %vm177 = vcmp.eq.s32.totalorder %v175, 0
    %v178 = vxor.u32 %v173, 2147483648
    %v179 = vsel %vm177, %v165, %v178
    %vm180 = vcmp.eq.s32.totalorder %v175, 2
    %v181 = vxor.u32 %v165, 2147483648
    %v182 = vsel %vm180, %v181, %v173
    %v183 = vsel %vm176, %v179, %v182
    %v184 = vsel %vm174, nan, %v183
    %v185 = vand.u32 2147483647, %v30
    %vm186 = vcmp.le.f32.partialorder %v185, 0.7853982
    %vm187 = vcmp.lt.s32.totalorder %v30, 0
    %v188 = vand.u32 %v30, 2139095040
    %v189 = vshrl.u32 %v188, 23
    %v190 = vsub.s32 %v189, 127
    %v191 = vand.u32 2147483647, %v30
    %v192 = vand.u32 %v191, 8388607
    %v193 = vor.u32 %v192, 8388608
    %v194 = vsub.s32 0, %v193
    %v195 = vadd.s32 %v190, 1
    %vm196 = vcmp.gt.s32.totalorder %v195, 0
    %v197 = vsel %vm196, %v195, 0
    %v198 = vshrl.u32 %v197, 5
    %v199 = vand.u32 %v197, 31
    %v200 = vsub.s32 32, %v199
    %v201 = vshrl.u32 683565275, %v200
    %v202 = vshll.u32 683565275, %v199
    %v203 = vshrl.u32 2475754826, %v200
    %v204 = vor.u32 %v202, %v203
    %v205 = vshll.u32 2475754826, %v199
    %v206 = vshrl.u32 2131351028, %v200
    %v207 = vor.u32 %v205, %v206
    %v208 = vshll.u32 2131351028, %v199
    %v209 = vshrl.u32 2102212464, %v200
    %v210 = vor.u32 %v208, %v209
    %v211 = vshll.u32 2102212464, %v199
    %v212 = vshrl.u32 920167782, %v200
    %v213 = vor.u32 %v211, %v212
    %v214 = vshll.u32 920167782, %v199
    %v215 = vshrl.u32 1326507024, %v200
    %v216 = vor.u32 %v214, %v215
    %vm217 = vcmp.lt.s32.totalorder %v198, 1
    %vm218 = vcmp.lt.s32.totalorder %v198, 2
    %vm219 = vcmp.lt.s32.totalorder %v198, 3
    %vm220 = vcmp.lt.s32.totalorder %v198, 4
    %v221 = vsel %vm217, %v201, %v204
    %v222 = vsel %vm220, %v210, 2102212464
    %v223 = vsel %vm219, %v207, %v222
    %v224 = vsel %vm218, %v221, %v223
    %v225 = vsel %vm217, %v204, %v207
    %v226 = vsel %vm220, %v213, 920167782
    %v227 = vsel %vm219, %v210, %v226
    %v228 = vsel %vm218, %v225, %v227
    %v229 = vsel %vm217, %v207, %v210
    %v230 = vsel %vm220, %v216, 1326507024
    %v231 = vsel %vm219, %v213, %v230
    %v232 = vsel %vm218, %v229, %v231
    %v233 = vshll.u32 %v193, 8
    %v234 = vand.u32 %v233, 65535
    %v235 = vshrl.u32 %v233, 16
    %v236 = vand.u32 %v232, 65535
    %v237 = vshrl.u32 %v232, 16
    %v238 = vmul.u32 %v234, %v236
    %v239 = vmul.u32 %v234, %v237
    %v240 = vmul.u32 %v235, %v236
    %v241 = vmul.u32 %v235, %v237
    %v242 = vshll.u32 %v239, 16
    %v243 = vshrl.u32 %v239, 16
    %v244 = vshll.u32 %v240, 16
    %v245 = vshrl.u32 %v240, 16
    %vm246 = vc.u32 %v238, %v242
    %v247 = vsel %vm246, 1, 0
    %v248 = vadd.s32 %v238, %v242
    %v249 = vadd.s32 %v241, %v247
    %vm250 = vc.u32 %v248, %v244
    %v251 = vsel %vm250, 1, 0
    %v252 = vadd.s32 %v248, %v244
    %v253 = vadd.s32 %v249, %v251
    %v254 = vadd.s32 %v253, %v243
    %v255 = vadd.s32 %v254, %v245
    %v256 = vand.u32 %v233, 65535
    %v257 = vshrl.u32 %v233, 16
    %v258 = vand.u32 %v228, 65535
    %v259 = vshrl.u32 %v228, 16
    %v260 = vmul.u32 %v256, %v258
    %v261 = vmul.u32 %v256, %v259
    %v262 = vmul.u32 %v257, %v258
    %v263 = vmul.u32 %v257, %v259
    %v264 = vshll.u32 %v261, 16
    %v265 = vshrl.u32 %v261, 16
    %v266 = vshll.u32 %v262, 16
    %v267 = vshrl.u32 %v262, 16
    %vm268 = vc.u32 %v260, %v264
    %v269 = vsel %vm268, 1, 0
    %v270 = vadd.s32 %v260, %v264
    %v271 = vadd.s32 %v263, %v269
    %vm272 = vc.u32 %v270, %v266
    %v273 = vsel %vm272, 1, 0
    %v274 = vadd.s32 %v270, %v266
    %v275 = vadd.s32 %v271, %v273
    %v276 = vadd.s32 %v275, %v265
    %v277 = vadd.s32 %v276, %v267
    %v278 = vmul.u32 %v233, %v224
    %v279 = vadd.s32 %v255, %v274
    %vm280 = vc.u32 %v255, %v274
    %v281 = vadd.s32 %v277, 1
    %v282 = vsel %vm280, %v281, %v277
    %v283 = vadd.s32 %v278, %v282
    %v284 = vadd.s32 %v283, 536870912
    %v285 = vshrl.u32 %v284, 30
    %v286 = vshll.u32 %v285, 30
    %v287 = vsub.s32 %v283, %v286
    %vm288 = vcmp.lt.s32.totalorder %v287, 0
    %v289 = vsub.s32 0, %v287
    %v290 = vsel %vm288, %v289, %v287
    %v291 = vclz %v290
    %v292 = vsub.s32 %v291, 2
    %vm293 = vcmp.gt.s32.totalorder 0, %v292
    %v294 = vsel %vm293, 0, %v292
    %v295 = vsub.s32 32, %v294
    %v296 = vshll.u32 %v287, %v294
    %v297 = vshrl.u32 %v279, %v295
    %v298 = vor.u32 %v296, %v297
    %v299 = vsub.s32 4294967266, %v294
    %v300 = vadd.s32 %v299, 127
    %v301 = vshll.u32 %v300, 23
    %v302 = vor.u32 4788187, %v301
    %v303 = vand.u32 2147483647, %v302
    %v305 = vcvt.s32.f32 %v298
    %v306 = vmul.f32 %v305, %v303
    %v307 = vxor.u32 %v306, 2147483648
    %v308 = vsel %vm187, %v307, %v306
    %v309 = vsub.s32 4, %v285
    %v310 = vsel %vm187, %v309, %v285
    %v311 = vsel %vm186, %v30, %v308
    %v312 = vsel %vm186, 0, %v310
    %v313 = vmul.f32 %v311, %v311
    %v314 = vmul.f32 %v313, -0.001358992
    %v315 = vadd.f32 %v314, 0.041655596
    %v316 = vmul.f32 %v313, %v315
    %v317 = vadd.f32 %v316, -0.4999988
    %v318 = vmul.f32 %v313, %v317
    %v319 = vadd.f32 1.0, %v318
    %v320 = vmul.f32 %v311, %v311
    %v321 = vmul.f32 %v320, -0.00019511016
    %v322 = vadd.f32 %v321, 0.008332121
    %v323 = vmul.f32 %v320, %v322
    %v324 = vadd.f32 %v323, -0.16666654
    %v325 = vmul.f32 %v320, %v324
    %v326 = vadd.f32 %v325, 1.0
    %v327 = vmul.f32 %v326, %v311
    %vm328 = vweird.f32 %v30
    %v329 = vadd.s32 %v312, 3
    %v330 = vand.u32 %v329, 3
    %vm331 = vcmp.lt.s32.totalorder %v330, 2
    %vm332 = vcmp.eq.s32.totalorder %v330, 0
    %v333 = vxor.u32 %v327, 2147483648
    %v334 = vsel %vm332, %v319, %v333
    %vm335 = vcmp.eq.s32.totalorder %v330, 2
    %v336 = vxor.u32 %v319, 2147483648
    %v337 = vsel %vm335, %v336, %v327
    %v338 = vsel %vm331, %v334, %v337
    %v339 = vsel %vm328, nan, %v338
    %v340 = vand.u32 2147483647, %v23
    %vm341 = vcmp.le.f32.partialorder %v340, 0.7853982
    %vm342 = vcmp.lt.s32.totalorder %v23, 0
    %v343 = vand.u32 %v23, 2139095040
    %v344 = vshrl.u32 %v343, 23
    %v345 = vsub.s32 %v344, 127
    %v346 = vand.u32 2147483647, %v23
    %v347 = vand.u32 %v346, 8388607
    %v348 = vor.u32 %v347, 8388608
    %v349 = vsub.s32 0, %v348
    %v350 = vadd.s32 %v345, 1
    %vm351 = vcmp.gt.s32.totalorder %v350, 0
    %v352 = vsel %vm351, %v350, 0
    %v353 = vshrl.u32 %v352, 5
    %v354 = vand.u32 %v352, 31
    %v355 = vsub.s32 32, %v354
    %v356 = vshrl.u32 683565275, %v355
    %v357 = vshll.u32 683565275, %v354
    %v358 = vshrl.u32 2475754826, %v355
    %v359 = vor.u32 %v357, %v358
    %v360 = vshll.u32 2475754826, %v354
    %v361 = vshrl.u32 2131351028, %v355
    %v362 = vor.u32 %v360, %v361
    %v363 = vshll.u32 2131351028, %v354
    %v364 = vshrl.u32 2102212464, %v355
    %v365 = vor.u32 %v363, %v364
    %v366 = vshll.u32 2102212464, %v354
    %v367 = vshrl.u32 920167782, %v355
    %v368 = vor.u32 %v366, %v367
    %v369 = vshll.u32 920167782, %v354
    %v370 = vshrl.u32 1326507024, %v355
    %v371 = vor.u32 %v369, %v370
    %vm372 = vcmp.lt.s32.totalorder %v353, 1
    %vm373 = vcmp.lt.s32.totalorder %v353, 2
    %vm374 = vcmp.lt.s32.totalorder %v353, 3
    %vm375 = vcmp.lt.s32.totalorder %v353, 4
    %v376 = vsel %vm372, %v356, %v359
    %v377 = vsel %vm375, %v365, 2102212464
    %v378 = vsel %vm374, %v362, %v377
    %v379 = vsel %vm373, %v376, %v378
    %v380 = vsel %vm372, %v359, %v362
    %v381 = vsel %vm375, %v368, 920167782
    %v382 = vsel %vm374, %v365, %v381
    %v383 = vsel %vm373, %v380, %v382
    %v384 = vsel %vm372, %v362, %v365
    %v385 = vsel %vm375, %v371, 1326507024
    %v386 = vsel %vm374, %v368, %v385
    %v387 = vsel %vm373, %v384, %v386
    %v388 = vshll.u32 %v348, 8
    %v389 = vand.u32 %v388, 65535
    %v390 = vshrl.u32 %v388, 16
    %v391 = vand.u32 %v387, 65535
    %v392 = vshrl.u32 %v387, 16
    %v393 = vmul.u32 %v389, %v391
    %v394 = vmul.u32 %v389, %v392
    %v395 = vmul.u32 %v390, %v391
    %v396 = vmul.u32 %v390, %v392
    %v397 = vshll.u32 %v394, 16
    %v398 = vshrl.u32 %v394, 16
    %v399 = vshll.u32 %v395, 16
    %v400 = vshrl.u32 %v395, 16
    %vm401 = vc.u32 %v393, %v397
    %v402 = vsel %vm401, 1, 0
    %v403 = vadd.s32 %v393, %v397
    %v404 = vadd.s32 %v396, %v402
    %vm405 = vc.u32 %v403, %v399
    %v406 = vsel %vm405, 1, 0
    %v407 = vadd.s32 %v403, %v399
    %v408 = vadd.s32 %v404, %v406
    %v409 = vadd.s32 %v408, %v398
    %v410 = vadd.s32 %v409, %v400
    %v411 = vand.u32 %v388, 65535
    %v412 = vshrl.u32 %v388, 16
    %v413 = vand.u32 %v383, 65535
    %v414 = vshrl.u32 %v383, 16
    %v415 = vmul.u32 %v411, %v413
    %v416 = vmul.u32 %v411, %v414
    %v417 = vmul.u32 %v412, %v413
    %v418 = vmul.u32 %v412, %v414
    %v419 = vshll.u32 %v416, 16
    %v420 = vshrl.u32 %v416, 16
    %v421 = vshll.u32 %v417, 16
    %v422 = vshrl.u32 %v417, 16
    %vm423 = vc.u32 %v415, %v419
    %v424 = vsel %vm423, 1, 0
    %v425 = vadd.s32 %v415, %v419
    %v426 = vadd.s32 %v418, %v424
    %vm427 = vc.u32 %v425, %v421
    %v428 = vsel %vm427, 1, 0
    %v429 = vadd.s32 %v425, %v421
    %v430 = vadd.s32 %v426, %v428
    %v431 = vadd.s32 %v430, %v420
    %v432 = vadd.s32 %v431, %v422
    %v433 = vmul.u32 %v388, %v379
    %v434 = vadd.s32 %v410, %v429
    %vm435 = vc.u32 %v410, %v429
    %v436 = vadd.s32 %v432, 1
    %v437 = vsel %vm435, %v436, %v432
    %v438 = vadd.s32 %v433, %v437
    %v439 = vadd.s32 %v438, 536870912
    %v440 = vshrl.u32 %v439, 30
    %v441 = vshll.u32 %v440, 30
    %v442 = vsub.s32 %v438, %v441
    %vm443 = vcmp.lt.s32.totalorder %v442, 0
    %v444 = vsub.s32 0, %v442
    %v445 = vsel %vm443, %v444, %v442
    %v446 = vclz %v445
    %v447 = vsub.s32 %v446, 2
    %vm448 = vcmp.gt.s32.totalorder 0, %v447
    %v449 = vsel %vm448, 0, %v447
    %v450 = vsub.s32 32, %v449
    %v451 = vshll.u32 %v442, %v449
    %v452 = vshrl.u32 %v434, %v450
    %v453 = vor.u32 %v451, %v452
    %v454 = vsub.s32 4294967266, %v449
    %v455 = vadd.s32 %v454, 127
    %v456 = vshll.u32 %v455, 23
    %v457 = vor.u32 4788187, %v456
    %v458 = vand.u32 2147483647, %v457
    %v460 = vcvt.s32.f32 %v453
    %v461 = vmul.f32 %v460, %v458
    %v462 = vxor.u32 %v461, 2147483648
    %v463 = vsel %vm342, %v462, %v461
    %v464 = vsub.s32 4, %v440
    %v465 = vsel %vm342, %v464, %v440
    %v466 = vsel %vm341, %v23, %v463
    %v467 = vsel %vm341, 0, %v465
    %v468 = vmul.f32 %v466, %v466
    %v469 = vmul.f32 %v468, -0.001358992
    %v470 = vadd.f32 %v469, 0.041655596
    %v471 = vmul.f32 %v468, %v470
    %v472 = vadd.f32 %v471, -0.4999988
    %v473 = vmul.f32 %v468, %v472
    %v474 = vadd.f32 1.0, %v473
    %v475 = vmul.f32 %v466, %v466
    %v476 = vmul.f32 %v475, -0.00019511016
    %v477 = vadd.f32 %v476, 0.008332121
    %v478 = vmul.f32 %v475, %v477
    %v479 = vadd.f32 %v478, -0.16666654
    %v480 = vmul.f32 %v475, %v479
    %v481 = vadd.f32 %v480, 1.0
    %v482 = vmul.f32 %v481, %v466
    %vm483 = vweird.f32 %v23
    %v484 = vadd.s32 %v467, 3
    %v485 = vand.u32 %v484, 3
    %vm486 = vcmp.lt.s32.totalorder %v485, 2
    %vm487 = vcmp.eq.s32.totalorder %v485, 0
    %v488 = vxor.u32 %v482, 2147483648
    %v489 = vsel %vm487, %v474, %v488
    %vm490 = vcmp.eq.s32.totalorder %v485, 2
    %v491 = vxor.u32 %v474, 2147483648
    %v492 = vsel %vm490, %v491, %v482
    %v493 = vsel %vm486, %v489, %v492
    %v494 = vsel %vm483, nan, %v493
    %v495 = vand.u32 2147483647, %v27
    %vm496 = vcmp.le.f32.partialorder %v495, 0.7853982
    %vm497 = vcmp.lt.s32.totalorder %v27, 0
    %v498 = vand.u32 %v27, 2139095040
    %v499 = vshrl.u32 %v498, 23
    %v500 = vsub.s32 %v499, 127
    %v501 = vand.u32 2147483647, %v27
    %v502 = vand.u32 %v501, 8388607
    %v503 = vor.u32 %v502, 8388608
    %v504 = vsub.s32 0, %v503
    %v505 = vadd.s32 %v500, 1
    %vm506 = vcmp.gt.s32.totalorder %v505, 0
    %v507 = vsel %vm506, %v505, 0
    %v508 = vshrl.u32 %v507, 5
    %v509 = vand.u32 %v507, 31
    %v510 = vsub.s32 32, %v509
    %v511 = vshrl.u32 683565275, %v510
    %v512 = vshll.u32 683565275, %v509
    %v513 = vshrl.u32 2475754826, %v510
    %v514 = vor.u32 %v512, %v513
    %v515 = vshll.u32 2475754826, %v509
    %v516 = vshrl.u32 2131351028, %v510
    %v517 = vor.u32 %v515, %v516
    %v518 = vshll.u32 2131351028, %v509
    %v519 = vshrl.u32 2102212464, %v510
    %v520 = vor.u32 %v518, %v519
    %v521 = vshll.u32 2102212464, %v509
    %v522 = vshrl.u32 920167782, %v510
    %v523 = vor.u32 %v521, %v522
    %v524 = vshll.u32 920167782, %v509
    %v525 = vshrl.u32 1326507024, %v510
    %v526 = vor.u32 %v524, %v525
    %vm527 = vcmp.lt.s32.totalorder %v508, 1
    %vm528 = vcmp.lt.s32.totalorder %v508, 2
    %vm529 = vcmp.lt.s32.totalorder %v508, 3
    %vm530 = vcmp.lt.s32.totalorder %v508, 4
    %v531 = vsel %vm527, %v511, %v514
    %v532 = vsel %vm530, %v520, 2102212464
    %v533 = vsel %vm529, %v517, %v532
    %v534 = vsel %vm528, %v531, %v533
    %v535 = vsel %vm527, %v514, %v517
    %v536 = vsel %vm530, %v523, 920167782
    %v537 = vsel %vm529, %v520, %v536
    %v538 = vsel %vm528, %v535, %v537
    %v539 = vsel %vm527, %v517, %v520
    %v540 = vsel %vm530, %v526, 1326507024
    %v541 = vsel %vm529, %v523, %v540
    %v542 = vsel %vm528, %v539, %v541
    %v543 = vshll.u32 %v503, 8
    %v544 = vand.u32 %v543, 65535
    %v545 = vshrl.u32 %v543, 16
    %v546 = vand.u32 %v542, 65535
    %v547 = vshrl.u32 %v542, 16
    %v548 = vmul.u32 %v544, %v546
    %v549 = vmul.u32 %v544, %v547
    %v550 = vmul.u32 %v545, %v546
    %v551 = vmul.u32 %v545, %v547
    %v552 = vshll.u32 %v549, 16
    %v553 = vshrl.u32 %v549, 16
    %v554 = vshll.u32 %v550, 16
    %v555 = vshrl.u32 %v550, 16
    %vm556 = vc.u32 %v548, %v552
    %v557 = vsel %vm556, 1, 0
    %v558 = vadd.s32 %v548, %v552
    %v559 = vadd.s32 %v551, %v557
    %vm560 = vc.u32 %v558, %v554
    %v561 = vsel %vm560, 1, 0
    %v562 = vadd.s32 %v558, %v554
    %v563 = vadd.s32 %v559, %v561
    %v564 = vadd.s32 %v563, %v553
    %v565 = vadd.s32 %v564, %v555
    %v566 = vand.u32 %v543, 65535
    %v567 = vshrl.u32 %v543, 16
    %v568 = vand.u32 %v538, 65535
    %v569 = vshrl.u32 %v538, 16
    %v570 = vmul.u32 %v566, %v568
    %v571 = vmul.u32 %v566, %v569
    %v572 = vmul.u32 %v567, %v568
    %v573 = vmul.u32 %v567, %v569
    %v574 = vshll.u32 %v571, 16
    %v575 = vshrl.u32 %v571, 16
    %v576 = vshll.u32 %v572, 16
    %v577 = vshrl.u32 %v572, 16
    %vm578 = vc.u32 %v570, %v574
    %v579 = vsel %vm578, 1, 0
    %v580 = vadd.s32 %v570, %v574
    %v581 = vadd.s32 %v573, %v579
    %vm582 = vc.u32 %v580, %v576
    %v583 = vsel %vm582, 1, 0
    %v584 = vadd.s32 %v580, %v576
    %v585 = vadd.s32 %v581, %v583
    %v586 = vadd.s32 %v585, %v575
    %v587 = vadd.s32 %v586, %v577
    %v588 = vmul.u32 %v543, %v534
    %v589 = vadd.s32 %v565, %v584
    %vm590 = vc.u32 %v565, %v584
    %v591 = vadd.s32 %v587, 1
    %v592 = vsel %vm590, %v591, %v587
    %v593 = vadd.s32 %v588, %v592
    %v594 = vadd.s32 %v593, 536870912
    %v595 = vshrl.u32 %v594, 30
    %v596 = vshll.u32 %v595, 30
    %v597 = vsub.s32 %v593, %v596
    %vm598 = vcmp.lt.s32.totalorder %v597, 0
    %v599 = vsub.s32 0, %v597
    %v600 = vsel %vm598, %v599, %v597
    %v601 = vclz %v600
    %v602 = vsub.s32 %v601, 2
    %vm603 = vcmp.gt.s32.totalorder 0, %v602
    %v604 = vsel %vm603, 0, %v602
    %v605 = vsub.s32 32, %v604
    %v606 = vshll.u32 %v597, %v604
    %v607 = vshrl.u32 %v589, %v605
    %v608 = vor.u32 %v606, %v607
    %v609 = vsub.s32 4294967266, %v604
    %v610 = vadd.s32 %v609, 127
    %v611 = vshll.u32 %v610, 23
    %v612 = vor.u32 4788187, %v611
    %v613 = vand.u32 2147483647, %v612
    %v615 = vcvt.s32.f32 %v608
    %v616 = vmul.f32 %v615, %v613
    %v617 = vxor.u32 %v616, 2147483648
    %v618 = vsel %vm497, %v617, %v616
    %v619 = vsub.s32 4, %v595
    %v620 = vsel %vm497, %v619, %v595
    %v621 = vsel %vm496, %v27, %v618
    %v622 = vsel %vm496, 0, %v620
    %v623 = vmul.f32 %v621, %v621
    %v624 = vmul.f32 %v623, -0.001358992
    %v625 = vadd.f32 %v624, 0.041655596
    %v626 = vmul.f32 %v623, %v625
    %v627 = vadd.f32 %v626, -0.4999988
    %v628 = vmul.f32 %v623, %v627
    %v629 = vadd.f32 1.0, %v628
    %v630 = vmul.f32 %v621, %v621
    %v631 = vmul.f32 %v630, -0.00019511016
    %v632 = vadd.f32 %v631, 0.008332121
    %v633 = vmul.f32 %v630, %v632
    %v634 = vadd.f32 %v633, -0.16666654
    %v635 = vmul.f32 %v630, %v634
    %v636 = vadd.f32 %v635, 1.0
    %v637 = vmul.f32 %v636, %v621
    %vm638 = vweird.f32 %v27
    %v639 = vadd.s32 %v622, 3
    %v640 = vand.u32 %v639, 3
    %vm641 = vcmp.lt.s32.totalorder %v640, 2
    %vm642 = vcmp.eq.s32.totalorder %v640, 0
    %v643 = vxor.u32 %v637, 2147483648
    %v644 = vsel %vm642, %v629, %v643
    %vm645 = vcmp.eq.s32.totalorder %v640, 2
    %v646 = vxor.u32 %v629, 2147483648
    %v647 = vsel %vm645, %v646, %v637
    %v648 = vsel %vm641, %v644, %v647
    %v649 = vsel %vm638, nan, %v648
    %v650 = vmul.f32 %v25, %v25
    %v651 = vmul.f32 %v29, %v29
    %v652 = vmul.f32 %v339, %v339
    %v653 = vadd.f32 %v652, 1.0
    %v654 = vrcp.pop %v653
    %v655 = vmul.f32 %v653, %v654
    %v656 = vsub.f32 1.0, %v655
    %v657 = vmul.f32 %v654, %v656
    %v658 = vadd.f32 %v654, %v657
    %vm659 = vweird.f32 %v653
    %vm660 = vweird.f32 %v654
    %vm661 = vmor %vm659, %vm660
    %v662 = vsel %vm661, %v654, %v658
    %v663 = vand.u32 2147483647, %v653
    %vm664 = vcmp.eq.f32.partialorder %v663, 8.507059e+37
    %v665 = vand.u32 %v653, 2147483648
    %v666 = vor.u32 1.1754944e-38, %v665
    %v667 = vsel %vm664, %v666, %v662
    %v668 = vmul.f32 1.0, %v667
    %v669 = vmul.f32 %v649, 10.0
    %v670 = vmul.f32 %v669, %v184
    %v671 = vmul.f32 %v650, %v184
    %v672 = vadd.f32 %v671, %v651
    %v673 = vmul.f32 %v339, %v672
    %v674 = vmul.f32 %v494, 20.0
    %v675 = vsub.f32 %v670, %v673
    %v676 = vsub.f32 %v675, %v674
    %v677 = vmul.f32 %v676, %v668
    %v678 = vmul.f32 %v650, %v339
    %v679 = vsub.f32 %v678, %v669
    %v680 = vmul.f32 %v494, 10.0
    %v681 = vmul.f32 %v680, %v184
    %v682 = vmul.f32 %v651, %v339
    %v683 = vmul.f32 %v682, %v184
    %v684 = vadd.f32 %v679, %v681
    %v685 = vmul.f32 %v684, 2.0
    %v686 = vadd.f32 %v685, %v683
    %v687 = vmul.f32 %v686, %v668
    %v689 = vperm.slane %v25, 0
    %v690 = vperm.slane %v25, 1
    %v694 = vperm.slane %v677, 0
    %v695 = vperm.slane %v677, 1
    %v699 = vperm.slane %v29, 0
    %v700 = vperm.slane %v29, 1
    %v704 = vperm.slane %v687, 0
    %v705 = vperm.slane %v687, 1
    %vm708 = vcmask 1040384
    %v709 = vsel %vm708, %v689, %v694
    %v710 = vsel %vm708, %v690, %v695
    %vm711 = vcmask 1041408
    %v712 = vsel %vm711, %v709, %v699
    %v713 = vsel %vm711, %v710, %v700
    %vm714 = vcmask 1042432
    %v715 = vsel %vm714, %v712, %v704
    %v716 = vsel %vm714, %v713, %v705
    %v719 = vrot.slane %v716, 4
    %vm720 = vcmask 1043456
    %v721 = vsel %vm720, %v715, %v719
    %723 = vst [vmem:[#allocation5] sm:$0xff] %v721
    // Predicated region
    $region10: #{tpu_custom_call.1} parent=1 // pred_check
      _
    $region11: #{tpu_custom_call.1} parent=1 // pred_check_branch
      %725 = sbr.rel (0) target = $region13
    $region12: #{tpu_custom_call.1} parent=1 // pred_region
      %727 = vsyncadd [#allocation4], 0
      %s729 = sshll.u32 [#allocation5], 4
      %s730 = int_to_ptr.vmem [resolvable:$true] %s729
      %s731 = sshll.u32 %s1, 4
      %s732 = int_to_ptr.hbm [resolvable:$true] %s731
      %734 = dma.vmem_to_hbm [thread:$0]  %s730, 128, %s732, [#allocation4]
    $region13: #{tpu_custom_call.1} parent=1 // pred_fallthru
      _
    // Predicated region
    $region14: #{tpu_custom_call.1} parent=1 // pred_check
      _
    $region15: #{tpu_custom_call.1} parent=1 // pred_check_branch
      %736 = sbr.rel (0) target = $region17
    $region16: #{tpu_custom_call.1} parent=1 // pred_region
      %738 = dma.done [#allocation4], 128
    $region17: #{tpu_custom_call.1} parent=1 // pred_fallthru
      _
    %739 = vsyncpa [#allocation3], 1
    %740 = vsyncpa [#allocation4], 1

</llo_original>
